<compile_context>
chip_gen: v5e
topology: v5e:2x2
jax: 0.10.0
libtpu: 0.0.40
codegen_flags: <defaults>
</compile_context>

<pallas_src>
import functools

import jax
import jax.numpy as jnp
from jax.experimental import pallas as pl
from jax.experimental.pallas import tpu as pltpu

DROP_P = 0.5        # matches nn.Dropout(p=0.5) in the replaced head
HIDDEN = 128        # nn.Linear(in_features, 128)
N_CLASSES = 2       # nn.Linear(128, 2)
N_PAD = 128         # lane-dense padded output width


def tl_head_kernel(seed_ref, x_ref, w1_ref, b1_ref, w2_ref, b2_ref, o_ref, *,
                   train, drop_p):
    # ---- pooled backbone features + first head Linear, in one MXU pass -------
    # TODO(synk): the real pretrained torchvision backbone passed into
    # TransferLearningModel.__init__ cannot be reproduced without its checkpoint;
    # a global-avg-pool + linear projection (folded into w1/b1 here) stands in.
    x = x_ref[...]                                            # (TB, C*HW) float32
    h = jnp.dot(x, w1_ref[...],
                preferred_element_type=jnp.float32) + b1_ref[...]
    h = jnp.maximum(h, 0.0)                                   # ReLU (VPU, f32)

    if train:
        # Inverted dropout; per-grid-block seed so each batch tile draws an
        # independent mask. NOTE: the mask therefore depends on the chosen
        # tile_b (not bit-reproducible across batch sizes / TPU generations).
        pltpu.prng_seed(seed_ref[0] + pl.program_id(0))
        bits = pltpu.bitcast(pltpu.prng_random_bits(h.shape), jnp.uint32)
        keep_thr = jnp.uint32(min(int(round((1.0 - drop_p) * 2**32)), 2**32 - 1))
        h = jnp.where(bits < keep_thr, h * (1.0 / (1.0 - drop_p)), 0.0)
    # eval mode: Dropout is identity

    # Linear(128, 2), padded to 128 output lanes (zero columns beyond n_classes).
    logits = jnp.dot(h, w2_ref[...],
                     preferred_element_type=jnp.float32) + b2_ref[...]
    o_ref[...] = logits.astype(o_ref.dtype)                   # (TB, 128) bf16 store


def _pick_tile_b(batch, row_bytes, *, x_block_budget=10 << 20, min_grid_steps=4):
    """Batch tile for the (B, C*HW) x window.

    - Multiple of 8 (sublane-dense) unless a single block covers the whole batch.
    - Per-block f32 window capped at ~10 MiB so two in-flight buffers stay
      around 20 MiB: inside the 32 MiB scoped limit we request and well inside
      v7x's 64 MiB physical VMEM (v5e/v6e have 128 MiB, so the same cap is safe).
    - Additionally capped so the grid has >= min_grid_steps steps when the batch
      allows it, keeping both v7x TensorCores fed and the pipeline overlapped.
    """
    cap_vmem = max(8, (x_block_budget // max(row_bytes, 1)) // 8 * 8)
    cap_steps = max(8, (-(-batch // min_grid_steps)) // 8 * 8)
    tile = min(cap_vmem, cap_steps)
    return batch if tile >= batch else tile


def fold_params(params, hw):
    """Fold backbone projection, 1/HW pooling and the first head Linear into a
    single (C*HW, HIDDEN) weight, and pad the classifier to lane-dense N_PAD."""
    wb, bb, w1, b1, w2, b2 = params
    w_fused = (wb @ w1) * (1.0 / hw)                    # (C, HIDDEN), 1/HW folded in
    b_fused = bb @ w1 + b1                              # (1, HIDDEN)
    # Replicate each channel's fused row HW times so that
    #   (B, C*HW) @ (C*HW, HIDDEN) == mean-pool(x) @ w_fused.
    # (C*HW is small here; for very large images one would keep an in-kernel
    #  reduce instead of replicating the weight.)
    w_big = jnp.repeat(w_fused, hw, axis=0)             # (C*HW, HIDDEN)
    n_cls = w2.shape[1]
    w2_pad = jnp.zeros((w2.shape[0], N_PAD), w2.dtype).at[:, :n_cls].set(w2)
    b2_pad = jnp.zeros((1, N_PAD), b2.dtype).at[:, :n_cls].set(b2)
    return w_big, b_fused, w2_pad, b2_pad, n_cls


def transfer_learning_forward(x_nchw, params, *, seed=0, train=False):
    """Forward pass of TransferLearningModel for an NCHW image batch."""
    B, C, H, W = x_nchw.shape
    HW = H * W
    # Contiguous reshape only — no standalone dtype cast / extra HBM pass.
    x2d = x_nchw.reshape(B, C * HW).astype(jnp.float32)
    w_big, b_fused, w2_pad, b2_pad, n_cls = fold_params(params, HW)
    hidden = w_big.shape[1]
    k = C * HW

    tile_b = _pick_tile_b(B, row_bytes=k * 4)
    grid = (pl.cdiv(B, tile_b),)
    seed_arr = jnp.array([seed], dtype=jnp.int32)

    cost = pl.CostEstimate(
        flops=2 * B * (k * hidden + hidden * N_PAD),
        transcendentals=0,
        bytes_accessed=(B * k * 4 + k * hidden * 4 + hidden * N_PAD * 4
                        + 2 * N_PAD * 4 + B * N_PAD * 2),
    )

    def build(single_buffer_weights):
        def const_spec(shape):
            # Grid-constant operands: never re-DMA'd, so the second buffer is
            # pure VMEM waste — request single buffering when supported.
            if single_buffer_weights:
                return pl.BlockSpec(shape, lambda i, s: (0, 0),
                                    pipeline_mode=pl.Buffered(1))
            return pl.BlockSpec(shape, lambda i, s: (0, 0))

        return pl.pallas_call(
            functools.partial(tl_head_kernel, train=train, drop_p=DROP_P),
            out_shape=jax.ShapeDtypeStruct((B, N_PAD), jnp.bfloat16),
            grid_spec=pltpu.PrefetchScalarGridSpec(
                num_scalar_prefetch=1,              # seed -> SMEM
                grid=grid,
                in_specs=[
                    pl.BlockSpec((tile_b, k), lambda i, s: (i, 0)),  # x (tiled)
                    const_spec((k, hidden)),        # pool + backbone + fc1 fused
                    const_spec((1, hidden)),        # fused bias
                    const_spec((hidden, N_PAD)),    # fc2 weight (padded)
                    const_spec((1, N_PAD)),         # fc2 bias   (padded)
                ],
                out_specs=pl.BlockSpec((tile_b, N_PAD), lambda i, s: (i, 0)),
            ),
            compiler_params=pltpu.CompilerParams(
                dimension_semantics=("parallel",),   # megacore sharding on v7x
                vmem_limit_bytes=32 << 20,           # > v5e's 16 MiB default, <= v7x's 64 MiB
            ),
            cost_estimate=cost,
        )

    args = (seed_arr, x2d, w_big, b_fused, w2_pad, b2_pad)
    try:
        out = build(single_buffer_weights=True)(*args)
    except Exception:
        # pl.Buffered(1) not accepted on this jax build: fall back to default
        # double-buffered constant operands (costs ~0.6 MiB extra VMEM).
        out = build(single_buffer_weights=False)(*args)

    return out[:, :n_cls].astype(jnp.float32)


def init_params(key, c, d_in=32, hidden=HIDDEN, n_classes=N_CLASSES):
    """Deterministic synthetic parameters. d_in plays the role of
    `pretraind_model.heads[0].in_features` (768 for a real ViT-B)."""
    ks = jax.random.split(key, 5)
    wb = jax.random.normal(ks[0], (c, d_in), jnp.float32) * 0.1          # backbone stub proj
    bb = jnp.zeros((1, d_in), jnp.float32)
    w1 = jax.random.normal(ks[1], (d_in, hidden), jnp.float32) / jnp.sqrt(d_in)
    b1 = jax.random.normal(ks[2], (1, hidden), jnp.float32) * 0.01
    w2 = jax.random.normal(ks[3], (hidden, n_classes), jnp.float32) / jnp.sqrt(hidden)
    b2 = jax.random.normal(ks[4], (1, n_classes), jnp.float32) * 0.01
    return (wb, bb, w1, b1, w2, b2)


def _reference_forward(x_nchw, params):
    """Pure-JAX f32 reference (eval mode), matching the PyTorch forward."""
    wb, bb, w1, b1, w2, b2 = params
    B, C, H, W = x_nchw.shape
    pooled = jnp.mean(x_nchw.reshape(B, C, H * W).astype(jnp.float32), axis=-1)
    feats = pooled @ wb + bb
    h = jnp.maximum(feats @ w1 + b1, 0.0)
    return h @ w2 + b2


if __name__ == "__main__":
    key = jax.random.PRNGKey(0)
    kx, kp = jax.random.split(key)

    # Small NCHW image batch: batch=2, channels=4, spatial=16x16.
    x = jax.random.normal(kx, (2, 4, 16, 16), jnp.float32)
    params = init_params(kp, c=4, d_in=32, hidden=HIDDEN, n_classes=N_CLASSES)

    # feature_extractor=False only toggles requires_grad in PyTorch; the forward
    # pass is identical, so it does not affect this kernel.
    logits = transfer_learning_forward(x, params, seed=0, train=False)
    jax.block_until_ready(logits)

    assert logits.shape == (2, N_CLASSES) and logits.dtype == jnp.float32
    ref = _reference_forward(x, params)
    assert jnp.allclose(logits, ref, rtol=1e-2, atol=1e-2)
    print("KERNEL_OK")
</pallas_src>

<mosaic_0001>
module attributes {stable_mosaic.version = 11 : i64} {
  func.func @tl_head_kernel(%arg0: i32, %arg1: memref<1xi32, #tpu.memory_space<smem>>, %arg2: memref<2x1024xf32, #tpu.memory_space<vmem>>, %arg3: memref<1024x128xf32, #tpu.memory_space<vmem>>, %arg4: memref<1x128xf32, #tpu.memory_space<vmem>>, %arg5: memref<128x128xf32, #tpu.memory_space<vmem>>, %arg6: memref<1x128xf32, #tpu.memory_space<vmem>>, %arg7: memref<2x128xbf16, #tpu.memory_space<vmem>>) attributes {dimension_semantics = [#tpu.dimension_semantics<parallel>], iteration_bounds = array<i64: 1>, scalar_prefetch = 1 : i64, scratch_operands = 0 : i64, tpu.core_type = #tpu.core_type<tc>, window_params = [{transform_indices = @transform_0, window_bounds = array<i64: 2, 1024>}, {pipeline_mode = #tpu.pipeline_mode<synchronous>, transform_indices = @transform_1, window_bounds = array<i64: 1024, 128>}, {pipeline_mode = #tpu.pipeline_mode<synchronous>, transform_indices = @transform_2, window_bounds = array<i64: 1, 128>}, {pipeline_mode = #tpu.pipeline_mode<synchronous>, transform_indices = @transform_3, window_bounds = array<i64: 128, 128>}, {pipeline_mode = #tpu.pipeline_mode<synchronous>, transform_indices = @transform_4, window_bounds = array<i64: 1, 128>}, {transform_indices = @transform_5, window_bounds = array<i64: 2, 128>}]} {
    %c0 = arith.constant 0 : index
    %c0_0 = arith.constant 0 : index
    %0 = vector.load %arg2[%c0, %c0_0] : memref<2x1024xf32, #tpu.memory_space<vmem>>, vector<2x1024xf32>
    %c0_1 = arith.constant 0 : index
    %c0_2 = arith.constant 0 : index
    %1 = vector.load %arg3[%c0_1, %c0_2] : memref<1024x128xf32, #tpu.memory_space<vmem>>, vector<1024x128xf32>
    %cst = arith.constant dense<0.000000e+00> : vector<2x128xf32>
    %2 = tpu.matmul %0, %1, %cst {dimension_numbers = #tpu.dot_dimension_numbers<[1], [0], [0], [1], [0, 0, 1, 1], [], []>} : vector<2x1024xf32>, vector<1024x128xf32>, vector<2x128xf32> -> vector<2x128xf32>
    %c0_3 = arith.constant 0 : index
    %c0_4 = arith.constant 0 : index
    %3 = vector.load %arg4[%c0_3, %c0_4] : memref<1x128xf32, #tpu.memory_space<vmem>>, vector<1x128xf32>
    %4 = vector.broadcast %3 : vector<1x128xf32> to vector<2x128xf32>
    %5 = arith.addf %2, %4 : vector<2x128xf32>
    %cst_5 = arith.constant 0.000000e+00 : f32
    %6 = vector.broadcast %cst_5 : f32 to vector<2x128xf32>
    %7 = arith.maximumf %5, %6 : vector<2x128xf32>
    %c0_6 = arith.constant 0 : index
    %c0_7 = arith.constant 0 : index
    %8 = vector.load %arg5[%c0_6, %c0_7] : memref<128x128xf32, #tpu.memory_space<vmem>>, vector<128x128xf32>
    %cst_8 = arith.constant dense<0.000000e+00> : vector<2x128xf32>
    %9 = tpu.matmul %7, %8, %cst_8 {dimension_numbers = #tpu.dot_dimension_numbers<[1], [0], [0], [1], [0, 0, 1, 1], [], []>} : vector<2x128xf32>, vector<128x128xf32>, vector<2x128xf32> -> vector<2x128xf32>
    %c0_9 = arith.constant 0 : index
    %c0_10 = arith.constant 0 : index
    %10 = vector.load %arg6[%c0_9, %c0_10] : memref<1x128xf32, #tpu.memory_space<vmem>>, vector<1x128xf32>
    %11 = vector.broadcast %10 : vector<1x128xf32> to vector<2x128xf32>
    %12 = arith.addf %9, %11 : vector<2x128xf32>
    %13 = arith.truncf %12 : vector<2x128xf32> to vector<2x128xbf16>
    %c0_11 = arith.constant 0 : index
    %c0_12 = arith.constant 0 : index
    %14 = vector.load %arg7[%c0_11, %c0_12] : memref<2x128xbf16, #tpu.memory_space<vmem>>, vector<2x128xbf16>
    tpu.vector_store %arg7[%c0_11, %c0_12], %13 {strides = array<i32>} : memref<2x128xbf16, #tpu.memory_space<vmem>>, vector<2x128xbf16>,
    return
  }
  func.func @transform_0(%arg0: i32, %arg1: memref<1xi32, #tpu.memory_space<smem>>) -> (i32, i32) {
    %c0_i32 = arith.constant 0 : i32
    %c0_i32_0 = arith.constant 0 : i32
    return %arg0, %c0_i32 : i32, i32
  }
  func.func @transform_1(%arg0: i32, %arg1: memref<1xi32, #tpu.memory_space<smem>>) -> (i32, i32) {
    %c0_i32 = arith.constant 0 : i32
    %c0_i32_0 = arith.constant 0 : i32
    %c0_i32_1 = arith.constant 0 : i32
    return %c0_i32, %c0_i32_0 : i32, i32
  }
  func.func @transform_2(%arg0: i32, %arg1: memref<1xi32, #tpu.memory_space<smem>>) -> (i32, i32) {
    %c0_i32 = arith.constant 0 : i32
    %c0_i32_0 = arith.constant 0 : i32
    %c0_i32_1 = arith.constant 0 : i32
    return %c0_i32, %c0_i32_0 : i32, i32
  }
  func.func @transform_3(%arg0: i32, %arg1: memref<1xi32, #tpu.memory_space<smem>>) -> (i32, i32) {
    %c0_i32 = arith.constant 0 : i32
    %c0_i32_0 = arith.constant 0 : i32
    %c0_i32_1 = arith.constant 0 : i32
    return %c0_i32, %c0_i32_0 : i32, i32
  }
  func.func @transform_4(%arg0: i32, %arg1: memref<1xi32, #tpu.memory_space<smem>>) -> (i32, i32) {
    %c0_i32 = arith.constant 0 : i32
    %c0_i32_0 = arith.constant 0 : i32
    %c0_i32_1 = arith.constant 0 : i32
    return %c0_i32, %c0_i32_0 : i32, i32
  }
  func.func @transform_5(%arg0: i32, %arg1: memref<1xi32, #tpu.memory_space<smem>>) -> (i32, i32) {
    %c0_i32 = arith.constant 0 : i32
    %c0_i32_0 = arith.constant 0 : i32
    return %arg0, %c0_i32 : i32, i32
  }
}

module attributes {stable_mosaic.version = 11 : i64} {
  func.func @tl_head_kernel(%arg0: i32, %arg1: memref<1xi32, #tpu.memory_space<smem>>, %arg2: memref<2x1024xf32, #tpu.memory_space<vmem>>, %arg3: memref<1024x128xf32, #tpu.memory_space<vmem>>, %arg4: memref<1x128xf32, #tpu.memory_space<vmem>>, %arg5: memref<128x128xf32, #tpu.memory_space<vmem>>, %arg6: memref<1x128xf32, #tpu.memory_space<vmem>>, %arg7: memref<2x128xbf16, #tpu.memory_space<vmem>>) attributes {dimension_semantics = [#tpu.dimension_semantics<parallel>], iteration_bounds = array<i64: 1>, scalar_prefetch = 1 : i64, scratch_operands = 0 : i64, tpu.core_type = #tpu.core_type<tc>, window_params = [{transform_indices = @transform_0, window_bounds = array<i64: 2, 1024>}, {pipeline_mode = #tpu.pipeline_mode<synchronous>, transform_indices = @transform_1, window_bounds = array<i64: 1024, 128>}, {pipeline_mode = #tpu.pipeline_mode<synchronous>, transform_indices = @transform_2, window_bounds = array<i64: 1, 128>}, {pipeline_mode = #tpu.pipeline_mode<synchronous>, transform_indices = @transform_3, window_bounds = array<i64: 128, 128>}, {pipeline_mode = #tpu.pipeline_mode<synchronous>, transform_indices = @transform_4, window_bounds = array<i64: 1, 128>}, {transform_indices = @transform_5, window_bounds = array<i64: 2, 128>}]} {
    %c0 = arith.constant 0 : index
    %c0_0 = arith.constant 0 : index
    %0 = vector.load %arg2[%c0, %c0_0] : memref<2x1024xf32, #tpu.memory_space<vmem>>, vector<2x1024xf32>
    %c0_1 = arith.constant 0 : index
    %c0_2 = arith.constant 0 : index
    %1 = vector.load %arg3[%c0_1, %c0_2] : memref<1024x128xf32, #tpu.memory_space<vmem>>, vector<1024x128xf32>
    %cst = arith.constant dense<0.000000e+00> : vector<2x128xf32>
    %2 = tpu.matmul %0, %1, %cst {dimension_numbers = #tpu.dot_dimension_numbers<[1], [0], [0], [1], [0, 0, 1, 1], [], []>} : vector<2x1024xf32>, vector<1024x128xf32>, vector<2x128xf32> -> vector<2x128xf32>
    %c0_3 = arith.constant 0 : index
    %c0_4 = arith.constant 0 : index
    %3 = vector.load %arg4[%c0_3, %c0_4] : memref<1x128xf32, #tpu.memory_space<vmem>>, vector<1x128xf32>
    %4 = vector.broadcast %3 : vector<1x128xf32> to vector<2x128xf32>
    %5 = arith.addf %2, %4 : vector<2x128xf32>
    %cst_5 = arith.constant 0.000000e+00 : f32
    %6 = vector.broadcast %cst_5 : f32 to vector<2x128xf32>
    %7 = arith.maximumf %5, %6 : vector<2x128xf32>
    %c0_6 = arith.constant 0 : index
    %c0_7 = arith.constant 0 : index
    %8 = vector.load %arg5[%c0_6, %c0_7] : memref<128x128xf32, #tpu.memory_space<vmem>>, vector<128x128xf32>
    %cst_8 = arith.constant dense<0.000000e+00> : vector<2x128xf32>
    %9 = tpu.matmul %7, %8, %cst_8 {dimension_numbers = #tpu.dot_dimension_numbers<[1], [0], [0], [1], [0, 0, 1, 1], [], []>} : vector<2x128xf32>, vector<128x128xf32>, vector<2x128xf32> -> vector<2x128xf32>
    %c0_9 = arith.constant 0 : index
    %c0_10 = arith.constant 0 : index
    %10 = vector.load %arg6[%c0_9, %c0_10] : memref<1x128xf32, #tpu.memory_space<vmem>>, vector<1x128xf32>
    %11 = vector.broadcast %10 : vector<1x128xf32> to vector<2x128xf32>
    %12 = arith.addf %9, %11 : vector<2x128xf32>
    %13 = arith.truncf %12 : vector<2x128xf32> to vector<2x128xbf16>
    %c0_11 = arith.constant 0 : index
    %c0_12 = arith.constant 0 : index
    %14 = vector.load %arg7[%c0_11, %c0_12] : memref<2x128xbf16, #tpu.memory_space<vmem>>, vector<2x128xbf16>
    tpu.vector_store %arg7[%c0_11, %c0_12], %13 {strides = array<i32>} : memref<2x128xbf16, #tpu.memory_space<vmem>>, vector<2x128xbf16>,
    return
  }
  func.func @transform_0(%arg0: i32, %arg1: memref<1xi32, #tpu.memory_space<smem>>) -> (i32, i32) {
    %c0_i32 = arith.constant 0 : i32
    %c0_i32_0 = arith.constant 0 : i32
    return %arg0, %c0_i32 : i32, i32
  }
  func.func @transform_1(%arg0: i32, %arg1: memref<1xi32, #tpu.memory_space<smem>>) -> (i32, i32) {
    %c0_i32 = arith.constant 0 : i32
    %c0_i32_0 = arith.constant 0 : i32
    %c0_i32_1 = arith.constant 0 : i32
    return %c0_i32, %c0_i32_0 : i32, i32
  }
  func.func @transform_2(%arg0: i32, %arg1: memref<1xi32, #tpu.memory_space<smem>>) -> (i32, i32) {
    %c0_i32 = arith.constant 0 : i32
    %c0_i32_0 = arith.constant 0 : i32
    %c0_i32_1 = arith.constant 0 : i32
    return %c0_i32, %c0_i32_0 : i32, i32
  }
  func.func @transform_3(%arg0: i32, %arg1: memref<1xi32, #tpu.memory_space<smem>>) -> (i32, i32) {
    %c0_i32 = arith.constant 0 : i32
    %c0_i32_0 = arith.constant 0 : i32
    %c0_i32_1 = arith.constant 0 : i32
    return %c0_i32, %c0_i32_0 : i32, i32
  }
  func.func @transform_4(%arg0: i32, %arg1: memref<1xi32, #tpu.memory_space<smem>>) -> (i32, i32) {
    %c0_i32 = arith.constant 0 : i32
    %c0_i32_0 = arith.constant 0 : i32
    %c0_i32_1 = arith.constant 0 : i32
    return %c0_i32, %c0_i32_0 : i32, i32
  }
  func.func @transform_5(%arg0: i32, %arg1: memref<1xi32, #tpu.memory_space<smem>>) -> (i32, i32) {
    %c0_i32 = arith.constant 0 : i32
    %c0_i32_0 = arith.constant 0 : i32
    return %arg0, %c0_i32 : i32, i32
  }
}

</mosaic_0001>

<llo_original>
// kernel: tpu_custom_call.1
$region0: #{tpu_custom_call.1}
  #allocation0 [shape = 'u32[]', space=smem, size = 0x4, offset = 0x4, fixed_abs, tag = 'smem constant byte address 0x4 - core index']
  #allocation1 [shape = 'u32[72,128]{1,0:T(1,128)}', space=vmem, size = 0x9000, scoped, tag = 'internal scratch']
  #allocation2 [shape = 's32[1]{0}', space=sflag, size = 0x4, scoped, tag = 'scoped memory for tpu_custom_call.1']
  #allocation3 [shape = 's32[1]{0:T(128)S(6)}', space=smem, size = 0x200, scoped, tag = 'prefetched SMEM operand 0']
  %s0 = inlined_call_operand.<no memory space> [shape: s32[1], index: 0, kind: input, shape index: {}]
  %s1 = inlined_call_operand.hbm [shape: f32[2,1024], index: 1, kind: input, shape index: {}]
  %s2 = inlined_call_operand.hbm [shape: f32[1024,128], index: 2, kind: input, shape index: {}]
  %s3 = inlined_call_operand.vmem [shape: f32[1,128], index: 3, kind: input, shape index: {}]
  %s4 = inlined_call_operand.hbm [shape: f32[128,128], index: 4, kind: input, shape index: {}]
  %s5 = inlined_call_operand.vmem [shape: f32[1,128], index: 5, kind: input, shape index: {}]
  %s6 = inlined_call_operand.hbm [shape: bf16[2,128], index: 6, kind: output, shape index: {}]
  %s7 = sld [smem:[#allocation0]]
  $region42: #{tpu_custom_call.1} parent=0
    _
  %s9 = ssub.s32 1, %s7
  %s10 = scalar_select 0, %s9, %s7
  %11 = sst [smem:[#allocation3]] %s0
  $region1: #{tpu_custom_call.1} parent=0
    #allocation4 [shape = 'u8[8192]{0}', space=vmem, size = 0x2000, scoped, tag = 'input window, operand 1, single buffered']
    #allocation5 [shape = 's32[1]{0}', space=sflag, size = 0x4, scoped, tag = 'scoped memory for tpu_custom_call.1']
    #allocation6 [shape = 's32[1]{0}', space=sflag, size = 0x4, scoped, tag = 'scoped memory for tpu_custom_call.1']
    #allocation7 [shape = 'u8[524288]{0}', space=vmem, size = 0x80000, scoped, tag = 'input window, operand 2, single buffered']
    #allocation8 [shape = 's32[1]{0}', space=sflag, size = 0x4, scoped, tag = 'scoped memory for tpu_custom_call.1']
    #allocation9 [shape = 'u8[65536]{0}', space=vmem, size = 0x10000, scoped, tag = 'input window, operand 4, single buffered']
    #allocation10 [shape = 'u8[512]{0}', space=vmem, size = 0x400, scoped, tag = 'output window, operand 0, single buffered']
    %12 = vsyncpa [#allocation5], 0
    %13 = vsyncpa [#allocation8], 0
    %14 = vsyncpa [#allocation6], 0
    // Predicated region
    $region2: #{tpu_custom_call.1} parent=1 // pred_check
      _
    $region3: #{tpu_custom_call.1} parent=1 // pred_check_branch
      %16 = sbr.rel (0) target = $region5
    $region4: #{tpu_custom_call.1} parent=1 // pred_region
      %18 = vsyncadd [#allocation5], 0
      %s20 = sshll.u32 %s1, 4
      %s21 = int_to_ptr.hbm [resolvable:$true] %s20
      %s22 = sshll.u32 [#allocation4], 4
      %s23 = int_to_ptr.vmem [resolvable:$true] %s22
      %25 = dma.hbm_to_vmem [thread:$0]  %s21, 256, %s23, [#allocation5]
    $region5: #{tpu_custom_call.1} parent=1 // pred_fallthru
      _
    // Predicated region
    $region6: #{tpu_custom_call.1} parent=1 // pred_check
      _
    $region7: #{tpu_custom_call.1} parent=1 // pred_check_branch
      %27 = sbr.rel (0) target = $region9
    $region8: #{tpu_custom_call.1} parent=1 // pred_region
      %29 = vsyncadd [#allocation8], 0
      %s30 = sshll.u32 %s2, 4
      %s31 = int_to_ptr.hbm [resolvable:$true] %s30
      %s32 = sshll.u32 [#allocation7], 4
      %s33 = int_to_ptr.vmem [resolvable:$true] %s32
      %38 = dma.hbm_to_vmem [thread:$0]  %s31, 16384, %s33, [#allocation8], 128, 128, 8
    $region9: #{tpu_custom_call.1} parent=1 // pred_fallthru
      _
    // Predicated region
    $region10: #{tpu_custom_call.1} parent=1 // pred_check
      _
    $region11: #{tpu_custom_call.1} parent=1 // pred_check_branch
      %40 = sbr.rel (0) target = $region13
    $region12: #{tpu_custom_call.1} parent=1 // pred_region
      _
    $region13: #{tpu_custom_call.1} parent=1 // pred_fallthru
      _
    // Predicated region
    $region14: #{tpu_custom_call.1} parent=1 // pred_check
      _
    $region15: #{tpu_custom_call.1} parent=1 // pred_check_branch
      %42 = sbr.rel (0) target = $region17
    $region16: #{tpu_custom_call.1} parent=1 // pred_region
      %44 = vsyncadd [#allocation8], 0
      %s45 = sshll.u32 %s4, 4
      %s46 = int_to_ptr.hbm [resolvable:$true] %s45
      %s47 = sshll.u32 [#allocation9], 4
      %s48 = int_to_ptr.vmem [resolvable:$true] %s47
      %53 = dma.hbm_to_vmem [thread:$0]  %s46, 2048, %s48, [#allocation8], 128, 128, 8
    $region17: #{tpu_custom_call.1} parent=1 // pred_fallthru
      _
    // Predicated region
    $region18: #{tpu_custom_call.1} parent=1 // pred_check
      _
    $region19: #{tpu_custom_call.1} parent=1 // pred_check_branch
      %55 = sbr.rel (0) target = $region21
    $region20: #{tpu_custom_call.1} parent=1 // pred_region
      _
    $region21: #{tpu_custom_call.1} parent=1 // pred_fallthru
      _
    // Predicated region
    $region22: #{tpu_custom_call.1} parent=1 // pred_check
      _
    $region23: #{tpu_custom_call.1} parent=1 // pred_check_branch
      %57 = sbr.rel (0) target = $region25
    $region24: #{tpu_custom_call.1} parent=1 // pred_region
      %59 = dma.done [#allocation5], 256
    $region25: #{tpu_custom_call.1} parent=1 // pred_fallthru
      _
    // Predicated region
    $region26: #{tpu_custom_call.1} parent=1 // pred_check
      _
    $region27: #{tpu_custom_call.1} parent=1 // pred_check_branch
      %61 = sbr.rel (0) target = $region29
    $region28: #{tpu_custom_call.1} parent=1 // pred_region
      %63 = dma.done [#allocation8], 16384
    $region29: #{tpu_custom_call.1} parent=1 // pred_fallthru
      _
    // Predicated region
    $region30: #{tpu_custom_call.1} parent=1 // pred_check
      _
    $region31: #{tpu_custom_call.1} parent=1 // pred_check_branch
      %65 = sbr.rel (0) target = $region33
    $region32: #{tpu_custom_call.1} parent=1 // pred_region
      %67 = dma.done [#allocation8], 2048
    $region33: #{tpu_custom_call.1} parent=1 // pred_fallthru
      _
    %v68 = vld [vmem:[#allocation4] sm:$0xff]
    %v69 = vld [vmem:[#allocation4 + $0x8] sm:$0xff]
    %v70 = vld [vmem:[#allocation7] sm:$0xff]
    %v71 = vld [vmem:[#allocation7 + $0x8] sm:$0xff]
    %v72 = vld [vmem:[#allocation7 + $0x10] sm:$0xff]
    %v73 = vld [vmem:[#allocation7 + $0x18] sm:$0xff]
    %v74 = vld [vmem:[#allocation7 + $0x20] sm:$0xff]
    %v75 = vld [vmem:[#allocation7 + $0x28] sm:$0xff]
    %v76 = vld [vmem:[#allocation7 + $0x30] sm:$0xff]
    %v77 = vld [vmem:[#allocation7 + $0x38] sm:$0xff]
    %v78 = vld [vmem:[#allocation7 + $0x40] sm:$0xff]
    %v79 = vld [vmem:[#allocation7 + $0x48] sm:$0xff]
    %v80 = vld [vmem:[#allocation7 + $0x50] sm:$0xff]
    %v81 = vld [vmem:[#allocation7 + $0x58] sm:$0xff]
    %v82 = vld [vmem:[#allocation7 + $0x60] sm:$0xff]
    %v83 = vld [vmem:[#allocation7 + $0x68] sm:$0xff]
    %v84 = vld [vmem:[#allocation7 + $0x70] sm:$0xff]
    %v85 = vld [vmem:[#allocation7 + $0x78] sm:$0xff]
    %v86 = vld [vmem:[#allocation7 + $0x80] sm:$0xff]
    %v87 = vld [vmem:[#allocation7 + $0x88] sm:$0xff]
    %v88 = vld [vmem:[#allocation7 + $0x90] sm:$0xff]
    %v89 = vld [vmem:[#allocation7 + $0x98] sm:$0xff]
    %v90 = vld [vmem:[#allocation7 + $0xa0] sm:$0xff]
    %v91 = vld [vmem:[#allocation7 + $0xa8] sm:$0xff]
    %v92 = vld [vmem:[#allocation7 + $0xb0] sm:$0xff]
    %v93 = vld [vmem:[#allocation7 + $0xb8] sm:$0xff]
    %v94 = vld [vmem:[#allocation7 + $0xc0] sm:$0xff]
    %v95 = vld [vmem:[#allocation7 + $0xc8] sm:$0xff]
    %v96 = vld [vmem:[#allocation7 + $0xd0] sm:$0xff]
    %v97 = vld [vmem:[#allocation7 + $0xd8] sm:$0xff]
    %v98 = vld [vmem:[#allocation7 + $0xe0] sm:$0xff]
    %v99 = vld [vmem:[#allocation7 + $0xe8] sm:$0xff]
    %v100 = vld [vmem:[#allocation7 + $0xf0] sm:$0xff]
    %v101 = vld [vmem:[#allocation7 + $0xf8] sm:$0xff]
    %v102 = vld [vmem:[#allocation7 + $0x100] sm:$0xff]
    %v103 = vld [vmem:[#allocation7 + $0x108] sm:$0xff]
    %v104 = vld [vmem:[#allocation7 + $0x110] sm:$0xff]
    %v105 = vld [vmem:[#allocation7 + $0x118] sm:$0xff]
    %v106 = vld [vmem:[#allocation7 + $0x120] sm:$0xff]
    %v107 = vld [vmem:[#allocation7 + $0x128] sm:$0xff]
    %v108 = vld [vmem:[#allocation7 + $0x130] sm:$0xff]
    %v109 = vld [vmem:[#allocation7 + $0x138] sm:$0xff]
    %v110 = vld [vmem:[#allocation7 + $0x140] sm:$0xff]
    %v111 = vld [vmem:[#allocation7 + $0x148] sm:$0xff]
    %v112 = vld [vmem:[#allocation7 + $0x150] sm:$0xff]
    %v113 = vld [vmem:[#allocation7 + $0x158] sm:$0xff]
    %v114 = vld [vmem:[#allocation7 + $0x160] sm:$0xff]
    %v115 = vld [vmem:[#allocation7 + $0x168] sm:$0xff]
    %v116 = vld [vmem:[#allocation7 + $0x170] sm:$0xff]
    %v117 = vld [vmem:[#allocation7 + $0x178] sm:$0xff]
    %v118 = vld [vmem:[#allocation7 + $0x180] sm:$0xff]
    %v119 = vld [vmem:[#allocation7 + $0x188] sm:$0xff]
    %v120 = vld [vmem:[#allocation7 + $0x190] sm:$0xff]
    %v121 = vld [vmem:[#allocation7 + $0x198] sm:$0xff]
    %v122 = vld [vmem:[#allocation7 + $0x1a0] sm:$0xff]
    %v123 = vld [vmem:[#allocation7 + $0x1a8] sm:$0xff]
    %v124 = vld [vmem:[#allocation7 + $0x1b0] sm:$0xff]
    %v125 = vld [vmem:[#allocation7 + $0x1b8] sm:$0xff]
    %v126 = vld [vmem:[#allocation7 + $0x1c0] sm:$0xff]
    %v127 = vld [vmem:[#allocation7 + $0x1c8] sm:$0xff]
    %v128 = vld [vmem:[#allocation7 + $0x1d0] sm:$0xff]
    %v129 = vld [vmem:[#allocation7 + $0x1d8] sm:$0xff]
    %v130 = vld [vmem:[#allocation7 + $0x1e0] sm:$0xff]
    %v131 = vld [vmem:[#allocation7 + $0x1e8] sm:$0xff]
    %v132 = vld [vmem:[#allocation7 + $0x1f0] sm:$0xff]
    %v133 = vld [vmem:[#allocation7 + $0x1f8] sm:$0xff]
    %v134 = vld [vmem:[#allocation7 + $0x200] sm:$0xff]
    %v135 = vld [vmem:[#allocation7 + $0x208] sm:$0xff]
    %v136 = vld [vmem:[#allocation7 + $0x210] sm:$0xff]
    %v137 = vld [vmem:[#allocation7 + $0x218] sm:$0xff]
    %v138 = vld [vmem:[#allocation7 + $0x220] sm:$0xff]
    %v139 = vld [vmem:[#allocation7 + $0x228] sm:$0xff]
    %v140 = vld [vmem:[#allocation7 + $0x230] sm:$0xff]
    %v141 = vld [vmem:[#allocation7 + $0x238] sm:$0xff]
    %v142 = vld [vmem:[#allocation7 + $0x240] sm:$0xff]
    %v143 = vld [vmem:[#allocation7 + $0x248] sm:$0xff]
    %v144 = vld [vmem:[#allocation7 + $0x250] sm:$0xff]
    %v145 = vld [vmem:[#allocation7 + $0x258] sm:$0xff]
    %v146 = vld [vmem:[#allocation7 + $0x260] sm:$0xff]
    %v147 = vld [vmem:[#allocation7 + $0x268] sm:$0xff]
    %v148 = vld [vmem:[#allocation7 + $0x270] sm:$0xff]
    %v149 = vld [vmem:[#allocation7 + $0x278] sm:$0xff]
    %v150 = vld [vmem:[#allocation7 + $0x280] sm:$0xff]
    %v151 = vld [vmem:[#allocation7 + $0x288] sm:$0xff]
    %v152 = vld [vmem:[#allocation7 + $0x290] sm:$0xff]
    %v153 = vld [vmem:[#allocation7 + $0x298] sm:$0xff]
    %v154 = vld [vmem:[#allocation7 + $0x2a0] sm:$0xff]
    %v155 = vld [vmem:[#allocation7 + $0x2a8] sm:$0xff]
    %v156 = vld [vmem:[#allocation7 + $0x2b0] sm:$0xff]
    %v157 = vld [vmem:[#allocation7 + $0x2b8] sm:$0xff]
    %v158 = vld [vmem:[#allocation7 + $0x2c0] sm:$0xff]
    %v159 = vld [vmem:[#allocation7 + $0x2c8] sm:$0xff]
    %v160 = vld [vmem:[#allocation7 + $0x2d0] sm:$0xff]
    %v161 = vld [vmem:[#allocation7 + $0x2d8] sm:$0xff]
    %v162 = vld [vmem:[#allocation7 + $0x2e0] sm:$0xff]
    %v163 = vld [vmem:[#allocation7 + $0x2e8] sm:$0xff]
    %v164 = vld [vmem:[#allocation7 + $0x2f0] sm:$0xff]
    %v165 = vld [vmem:[#allocation7 + $0x2f8] sm:$0xff]
    %v166 = vld [vmem:[#allocation7 + $0x300] sm:$0xff]
    %v167 = vld [vmem:[#allocation7 + $0x308] sm:$0xff]
    %v168 = vld [vmem:[#allocation7 + $0x310] sm:$0xff]
    %v169 = vld [vmem:[#allocation7 + $0x318] sm:$0xff]
    %v170 = vld [vmem:[#allocation7 + $0x320] sm:$0xff]
    %v171 = vld [vmem:[#allocation7 + $0x328] sm:$0xff]
    %v172 = vld [vmem:[#allocation7 + $0x330] sm:$0xff]
    %v173 = vld [vmem:[#allocation7 + $0x338] sm:$0xff]
    %v174 = vld [vmem:[#allocation7 + $0x340] sm:$0xff]
    %v175 = vld [vmem:[#allocation7 + $0x348] sm:$0xff]
    %v176 = vld [vmem:[#allocation7 + $0x350] sm:$0xff]
    %v177 = vld [vmem:[#allocation7 + $0x358] sm:$0xff]
    %v178 = vld [vmem:[#allocation7 + $0x360] sm:$0xff]
    %v179 = vld [vmem:[#allocation7 + $0x368] sm:$0xff]
    %v180 = vld [vmem:[#allocation7 + $0x370] sm:$0xff]
    %v181 = vld [vmem:[#allocation7 + $0x378] sm:$0xff]
    %v182 = vld [vmem:[#allocation7 + $0x380] sm:$0xff]
    %v183 = vld [vmem:[#allocation7 + $0x388] sm:$0xff]
    %v184 = vld [vmem:[#allocation7 + $0x390] sm:$0xff]
    %v185 = vld [vmem:[#allocation7 + $0x398] sm:$0xff]
    %v186 = vld [vmem:[#allocation7 + $0x3a0] sm:$0xff]
    %v187 = vld [vmem:[#allocation7 + $0x3a8] sm:$0xff]
    %v188 = vld [vmem:[#allocation7 + $0x3b0] sm:$0xff]
    %v189 = vld [vmem:[#allocation7 + $0x3b8] sm:$0xff]
    %v190 = vld [vmem:[#allocation7 + $0x3c0] sm:$0xff]
    %v191 = vld [vmem:[#allocation7 + $0x3c8] sm:$0xff]
    %v192 = vld [vmem:[#allocation7 + $0x3d0] sm:$0xff]
    %v193 = vld [vmem:[#allocation7 + $0x3d8] sm:$0xff]
    %v194 = vld [vmem:[#allocation7 + $0x3e0] sm:$0xff]
    %v195 = vld [vmem:[#allocation7 + $0x3e8] sm:$0xff]
    %v196 = vld [vmem:[#allocation7 + $0x3f0] sm:$0xff]
    %v197 = vld [vmem:[#allocation7 + $0x3f8] sm:$0xff]
    %v198 = vld [vmem:[%s3] sm:$0x1]
    %v200 = vperm.slane %v198, 0
    %204 = vst [vmem:[#allocation1] ss:$4 sm:$0xff] %v68
    %s205 = scalar_lea.vmem [#allocation1], 32
    %206 = vst [vmem:[%s205] ss:$4 sm:$0xff] %v69
    %v207 = vld.sshfl [vmem:[#allocation1] sm:$0xff pattern:$0x73625140]
    %v208 = vld.sshfl [vmem:[#allocation1 + $0x8] sm:$0xff pattern:$0x73625140]
    %v209 = vld.sshfl [vmem:[#allocation1 + $0x10] sm:$0xff pattern:$0x73625140]
    %v210 = vld.sshfl [vmem:[#allocation1 + $0x18] sm:$0xff pattern:$0x73625140]
    %v211 = vld.sshfl [vmem:[#allocation1 + $0x20] sm:$0xff pattern:$0x73625140]
    %v212 = vld.sshfl [vmem:[#allocation1 + $0x28] sm:$0xff pattern:$0x73625140]
    %v213 = vld.sshfl [vmem:[#allocation1 + $0x30] sm:$0xff pattern:$0x73625140]
    %v214 = vld.sshfl [vmem:[#allocation1 + $0x38] sm:$0xff pattern:$0x73625140]
    %223 = vmatpush.msra.mxu0 %v85
    %224 = vmatpush.msra.mxu0 %v84
    %225 = vmatpush.msra.mxu0 %v83
    %226 = vmatpush.msra.mxu0 %v82
    %227 = vmatpush.msra.mxu0 %v81
    %228 = vmatpush.msra.mxu0 %v80
    %229 = vmatpush.msra.mxu0 %v79
    %230 = vmatpush.msra.mxu0 %v78
    %231 = vmatpush.msra.mxu0 %v77
    %232 = vmatpush.msra.mxu0 %v76
    %233 = vmatpush.msra.mxu0 %v75
    %234 = vmatpush.msra.mxu0 %v74
    %235 = vmatpush.msra.mxu0 %v73
    %236 = vmatpush.msra.mxu0 %v72
    %237 = vmatpush.msra.mxu0 %v71
    %238 = vmatpush.msra.mxu0 %v70
    %239 = vmatmul.f32.gmra.mxu0 %v207
    %v240 = vpop.f32.mrf.mxu0
    %v241 = vadd.f32 %v200, %v240
    %242 = vdwg.mxu0
    %243 = vmatpush.msra.mxu0 %v101
    %244 = vmatpush.msra.mxu0 %v100
    %245 = vmatpush.msra.mxu0 %v99
    %246 = vmatpush.msra.mxu0 %v98
    %247 = vmatpush.msra.mxu0 %v97
    %248 = vmatpush.msra.mxu0 %v96
    %249 = vmatpush.msra.mxu0 %v95
    %250 = vmatpush.msra.mxu0 %v94
    %251 = vmatpush.msra.mxu0 %v93
    %252 = vmatpush.msra.mxu0 %v92
    %253 = vmatpush.msra.mxu0 %v91
    %254 = vmatpush.msra.mxu0 %v90
    %255 = vmatpush.msra.mxu0 %v89
    %256 = vmatpush.msra.mxu0 %v88
    %257 = vmatpush.msra.mxu0 %v87
    %258 = vmatpush.msra.mxu0 %v86
    %259 = vmatmul.f32.gmra.mxu0 %v208
    %v260 = vpop.f32.mrf.mxu0
    %v261 = vadd.f32 %v241, %v260
    %262 = vdwg.mxu0
    %263 = vmatpush.msra.mxu0 %v117
    %264 = vmatpush.msra.mxu0 %v116
    %265 = vmatpush.msra.mxu0 %v115
    %266 = vmatpush.msra.mxu0 %v114
    %267 = vmatpush.msra.mxu0 %v113
    %268 = vmatpush.msra.mxu0 %v112
    %269 = vmatpush.msra.mxu0 %v111
    %270 = vmatpush.msra.mxu0 %v110
    %271 = vmatpush.msra.mxu0 %v109
    %272 = vmatpush.msra.mxu0 %v108
    %273 = vmatpush.msra.mxu0 %v107
    %274 = vmatpush.msra.mxu0 %v106
    %275 = vmatpush.msra.mxu0 %v105
    %276 = vmatpush.msra.mxu0 %v104
    %277 = vmatpush.msra.mxu0 %v103
    %278 = vmatpush.msra.mxu0 %v102
    %279 = vmatmul.f32.gmra.mxu0 %v209
    %v280 = vpop.f32.mrf.mxu0
    %v281 = vadd.f32 %v261, %v280
    %282 = vdwg.mxu0
    %283 = vmatpush.msra.mxu0 %v133
    %284 = vmatpush.msra.mxu0 %v132
    %285 = vmatpush.msra.mxu0 %v131
    %286 = vmatpush.msra.mxu0 %v130
    %287 = vmatpush.msra.mxu0 %v129
    %288 = vmatpush.msra.mxu0 %v128
    %289 = vmatpush.msra.mxu0 %v127
    %290 = vmatpush.msra.mxu0 %v126
    %291 = vmatpush.msra.mxu0 %v125
    %292 = vmatpush.msra.mxu0 %v124
    %293 = vmatpush.msra.mxu0 %v123
    %294 = vmatpush.msra.mxu0 %v122
    %295 = vmatpush.msra.mxu0 %v121
    %296 = vmatpush.msra.mxu0 %v120
    %297 = vmatpush.msra.mxu0 %v119
    %298 = vmatpush.msra.mxu0 %v118
    %299 = vmatmul.f32.gmra.mxu0 %v210
    %v300 = vpop.f32.mrf.mxu0
    %v301 = vadd.f32 %v281, %v300
    %302 = vdwg.mxu0
    %303 = vmatpush.msra.mxu0 %v149
    %304 = vmatpush.msra.mxu0 %v148
    %305 = vmatpush.msra.mxu0 %v147
    %306 = vmatpush.msra.mxu0 %v146
    %307 = vmatpush.msra.mxu0 %v145
    %308 = vmatpush.msra.mxu0 %v144
    %309 = vmatpush.msra.mxu0 %v143
    %310 = vmatpush.msra.mxu0 %v142
    %311 = vmatpush.msra.mxu0 %v141
    %312 = vmatpush.msra.mxu0 %v140
    %313 = vmatpush.msra.mxu0 %v139
    %314 = vmatpush.msra.mxu0 %v138
    %315 = vmatpush.msra.mxu0 %v137
    %316 = vmatpush.msra.mxu0 %v136
    %317 = vmatpush.msra.mxu0 %v135
    %318 = vmatpush.msra.mxu0 %v134
    %319 = vmatmul.f32.gmra.mxu0 %v211
    %v320 = vpop.f32.mrf.mxu0
    %v321 = vadd.f32 %v301, %v320
    %322 = vdwg.mxu0
    %323 = vmatpush.msra.mxu0 %v165
    %324 = vmatpush.msra.mxu0 %v164
    %325 = vmatpush.msra.mxu0 %v163
    %326 = vmatpush.msra.mxu0 %v162
    %327 = vmatpush.msra.mxu0 %v161
    %328 = vmatpush.msra.mxu0 %v160
    %329 = vmatpush.msra.mxu0 %v159
    %330 = vmatpush.msra.mxu0 %v158
    %331 = vmatpush.msra.mxu0 %v157
    %332 = vmatpush.msra.mxu0 %v156
    %333 = vmatpush.msra.mxu0 %v155
    %334 = vmatpush.msra.mxu0 %v154
    %335 = vmatpush.msra.mxu0 %v153
    %336 = vmatpush.msra.mxu0 %v152
    %337 = vmatpush.msra.mxu0 %v151
    %338 = vmatpush.msra.mxu0 %v150
    %339 = vmatmul.f32.gmra.mxu0 %v212
    %v340 = vpop.f32.mrf.mxu0
    %v341 = vadd.f32 %v321, %v340
    %342 = vdwg.mxu0
    %343 = vmatpush.msra.mxu0 %v181
    %344 = vmatpush.msra.mxu0 %v180
    %345 = vmatpush.msra.mxu0 %v179
    %346 = vmatpush.msra.mxu0 %v178
    %347 = vmatpush.msra.mxu0 %v177
    %348 = vmatpush.msra.mxu0 %v176
    %349 = vmatpush.msra.mxu0 %v175
    %350 = vmatpush.msra.mxu0 %v174
    %351 = vmatpush.msra.mxu0 %v173
    %352 = vmatpush.msra.mxu0 %v172
    %353 = vmatpush.msra.mxu0 %v171
    %354 = vmatpush.msra.mxu0 %v170
    %355 = vmatpush.msra.mxu0 %v169
    %356 = vmatpush.msra.mxu0 %v168
    %357 = vmatpush.msra.mxu0 %v167
    %358 = vmatpush.msra.mxu0 %v166
    %359 = vmatmul.f32.gmra.mxu0 %v213
    %v360 = vpop.f32.mrf.mxu0
    %v361 = vadd.f32 %v341, %v360
    %362 = vdwg.mxu0
    %363 = vmatpush.msra.mxu0 %v197
    %364 = vmatpush.msra.mxu0 %v196
    %365 = vmatpush.msra.mxu0 %v195
    %366 = vmatpush.msra.mxu0 %v194
    %367 = vmatpush.msra.mxu0 %v193
    %368 = vmatpush.msra.mxu0 %v192
    %369 = vmatpush.msra.mxu0 %v191
    %370 = vmatpush.msra.mxu0 %v190
    %371 = vmatpush.msra.mxu0 %v189
    %372 = vmatpush.msra.mxu0 %v188
    %373 = vmatpush.msra.mxu0 %v187
    %374 = vmatpush.msra.mxu0 %v186
    %375 = vmatpush.msra.mxu0 %v185
    %376 = vmatpush.msra.mxu0 %v184
    %377 = vmatpush.msra.mxu0 %v183
    %378 = vmatpush.msra.mxu0 %v182
    %379 = vmatmul.f32.gmra.mxu0 %v214
    %v380 = vpop.f32.mrf.mxu0
    %v381 = vadd.f32 %v361, %v380
    %382 = vdwg.mxu0
    %v383 = vmax.f32 %v381, 0.0
    %v384 = vld [vmem:[#allocation9] sm:$0xff]
    %v385 = vld [vmem:[#allocation9 + $0x8] sm:$0xff]
    %v386 = vld [vmem:[#allocation9 + $0x10] sm:$0xff]
    %v387 = vld [vmem:[#allocation9 + $0x18] sm:$0xff]
    %v388 = vld [vmem:[#allocation9 + $0x20] sm:$0xff]
    %v389 = vld [vmem:[#allocation9 + $0x28] sm:$0xff]
    %v390 = vld [vmem:[#allocation9 + $0x30] sm:$0xff]
    %v391 = vld [vmem:[#allocation9 + $0x38] sm:$0xff]
    %v392 = vld [vmem:[#allocation9 + $0x40] sm:$0xff]
    %v393 = vld [vmem:[#allocation9 + $0x48] sm:$0xff]
    %v394 = vld [vmem:[#allocation9 + $0x50] sm:$0xff]
    %v395 = vld [vmem:[#allocation9 + $0x58] sm:$0xff]
    %v396 = vld [vmem:[#allocation9 + $0x60] sm:$0xff]
    %v397 = vld [vmem:[#allocation9 + $0x68] sm:$0xff]
    %v398 = vld [vmem:[#allocation9 + $0x70] sm:$0xff]
    %v399 = vld [vmem:[#allocation9 + $0x78] sm:$0xff]
    %v400 = vld [vmem:[%s5] sm:$0x1]
    %v402 = vperm.slane %v400, 0
    %404 = vmatpush.msra.mxu0 %v399
    %405 = vmatpush.msra.mxu0 %v398
    %406 = vmatpush.msra.mxu0 %v397
    %407 = vmatpush.msra.mxu0 %v396
    %408 = vmatpush.msra.mxu0 %v395
    %409 = vmatpush.msra.mxu0 %v394
    %410 = vmatpush.msra.mxu0 %v393
    %411 = vmatpush.msra.mxu0 %v392
    %412 = vmatpush.msra.mxu0 %v391
    %413 = vmatpush.msra.mxu0 %v390
    %414 = vmatpush.msra.mxu0 %v389
    %415 = vmatpush.msra.mxu0 %v388
    %416 = vmatpush.msra.mxu0 %v387
    %417 = vmatpush.msra.mxu0 %v386
    %418 = vmatpush.msra.mxu0 %v385
    %419 = vmatpush.msra.mxu0 %v384
    %420 = vmatmul.f32.gmra.mxu0 %v383
    %v421 = vpop.f32.mrf.mxu0
    %v422 = vadd.f32 %v402, %v421
    %423 = vdwg.mxu0
    %v424 = vpack.c.bf16 %v422, %v422
    %425 = vst [vmem:[#allocation10] sm:$0x1] %v424
    // Predicated region
    $region34: #{tpu_custom_call.1} parent=1 // pred_check
      _
    $region35: #{tpu_custom_call.1} parent=1 // pred_check_branch
      %427 = sbr.rel (0) target = $region37
    $region36: #{tpu_custom_call.1} parent=1 // pred_region
      %429 = vsyncadd [#allocation6], 0
      %s431 = sshll.u32 [#allocation10], 4
      %s432 = int_to_ptr.vmem [resolvable:$true] %s431
      %s433 = sshll.u32 %s6, 4
      %s434 = int_to_ptr.hbm [resolvable:$true] %s433
      %436 = dma.vmem_to_hbm [thread:$0]  %s432, 16, %s434, [#allocation6]
    $region37: #{tpu_custom_call.1} parent=1 // pred_fallthru
      _
    // Predicated region
    $region38: #{tpu_custom_call.1} parent=1 // pred_check
      _
    $region39: #{tpu_custom_call.1} parent=1 // pred_check_branch
      %438 = sbr.rel (0) target = $region41
    $region40: #{tpu_custom_call.1} parent=1 // pred_region
      %440 = dma.done [#allocation6], 16
    $region41: #{tpu_custom_call.1} parent=1 // pred_fallthru
      _
    %441 = vsyncpa [#allocation5], 1
    %442 = vsyncpa [#allocation8], 1
    %443 = vsyncpa [#allocation6], 1

// kernel: tpu_custom_call.1
$region0: #{tpu_custom_call.1}
  #allocation0 [shape = 'u32[]', space=smem, size = 0x4, offset = 0x4, fixed_abs, tag = 'smem constant byte address 0x4 - core index']
  #allocation1 [shape = 'u32[72,128]{1,0:T(1,128)}', space=vmem, size = 0x9000, scoped, tag = 'internal scratch']
  #allocation2 [shape = 's32[1]{0}', space=sflag, size = 0x4, scoped, tag = 'scoped memory for tpu_custom_call.1']
  #allocation3 [shape = 's32[1]{0:T(128)S(6)}', space=smem, size = 0x200, scoped, tag = 'prefetched SMEM operand 0']
  %s0 = inlined_call_operand.<no memory space> [shape: s32[1], index: 0, kind: input, shape index: {}]
  %s1 = inlined_call_operand.hbm [shape: f32[2,1024], index: 1, kind: input, shape index: {}]
  %s2 = inlined_call_operand.hbm [shape: f32[1024,128], index: 2, kind: input, shape index: {}]
  %s3 = inlined_call_operand.vmem [shape: f32[1,128], index: 3, kind: input, shape index: {}]
  %s4 = inlined_call_operand.hbm [shape: f32[128,128], index: 4, kind: input, shape index: {}]
  %s5 = inlined_call_operand.vmem [shape: f32[1,128], index: 5, kind: input, shape index: {}]
  %s6 = inlined_call_operand.hbm [shape: bf16[2,128], index: 6, kind: output, shape index: {}]
  %s7 = sld [smem:[#allocation0]]
  $region42: #{tpu_custom_call.1} parent=0
    _
  %s9 = ssub.s32 1, %s7
  %s10 = scalar_select 0, %s9, %s7
  %11 = sst [smem:[#allocation3]] %s0
  $region1: #{tpu_custom_call.1} parent=0
    #allocation4 [shape = 'u8[8192]{0}', space=vmem, size = 0x2000, scoped, tag = 'input window, operand 1, single buffered']
    #allocation5 [shape = 's32[1]{0}', space=sflag, size = 0x4, scoped, tag = 'scoped memory for tpu_custom_call.1']
    #allocation6 [shape = 's32[1]{0}', space=sflag, size = 0x4, scoped, tag = 'scoped memory for tpu_custom_call.1']
    #allocation7 [shape = 'u8[524288]{0}', space=vmem, size = 0x80000, scoped, tag = 'input window, operand 2, single buffered']
    #allocation8 [shape = 's32[1]{0}', space=sflag, size = 0x4, scoped, tag = 'scoped memory for tpu_custom_call.1']
    #allocation9 [shape = 'u8[65536]{0}', space=vmem, size = 0x10000, scoped, tag = 'input window, operand 4, single buffered']
    #allocation10 [shape = 'u8[512]{0}', space=vmem, size = 0x400, scoped, tag = 'output window, operand 0, single buffered']
    %12 = vsyncpa [#allocation5], 0
    %13 = vsyncpa [#allocation8], 0
    %14 = vsyncpa [#allocation6], 0
    // Predicated region
    $region2: #{tpu_custom_call.1} parent=1 // pred_check
      _
    $region3: #{tpu_custom_call.1} parent=1 // pred_check_branch
      %16 = sbr.rel (0) target = $region5
    $region4: #{tpu_custom_call.1} parent=1 // pred_region
      %18 = vsyncadd [#allocation5], 0
      %s20 = sshll.u32 %s1, 4
      %s21 = int_to_ptr.hbm [resolvable:$true] %s20
      %s22 = sshll.u32 [#allocation4], 4
      %s23 = int_to_ptr.vmem [resolvable:$true] %s22
      %25 = dma.hbm_to_vmem [thread:$0]  %s21, 256, %s23, [#allocation5]
    $region5: #{tpu_custom_call.1} parent=1 // pred_fallthru
      _
    // Predicated region
    $region6: #{tpu_custom_call.1} parent=1 // pred_check
      _
    $region7: #{tpu_custom_call.1} parent=1 // pred_check_branch
      %27 = sbr.rel (0) target = $region9
    $region8: #{tpu_custom_call.1} parent=1 // pred_region
      %29 = vsyncadd [#allocation8], 0
      %s30 = sshll.u32 %s2, 4
      %s31 = int_to_ptr.hbm [resolvable:$true] %s30
      %s32 = sshll.u32 [#allocation7], 4
      %s33 = int_to_ptr.vmem [resolvable:$true] %s32
      %38 = dma.hbm_to_vmem [thread:$0]  %s31, 16384, %s33, [#allocation8], 128, 128, 8
    $region9: #{tpu_custom_call.1} parent=1 // pred_fallthru
      _
    // Predicated region
    $region10: #{tpu_custom_call.1} parent=1 // pred_check
      _
    $region11: #{tpu_custom_call.1} parent=1 // pred_check_branch
      %40 = sbr.rel (0) target = $region13
    $region12: #{tpu_custom_call.1} parent=1 // pred_region
      _
    $region13: #{tpu_custom_call.1} parent=1 // pred_fallthru
      _
    // Predicated region
    $region14: #{tpu_custom_call.1} parent=1 // pred_check
      _
    $region15: #{tpu_custom_call.1} parent=1 // pred_check_branch
      %42 = sbr.rel (0) target = $region17
    $region16: #{tpu_custom_call.1} parent=1 // pred_region
      %44 = vsyncadd [#allocation8], 0
      %s45 = sshll.u32 %s4, 4
      %s46 = int_to_ptr.hbm [resolvable:$true] %s45
      %s47 = sshll.u32 [#allocation9], 4
      %s48 = int_to_ptr.vmem [resolvable:$true] %s47
      %53 = dma.hbm_to_vmem [thread:$0]  %s46, 2048, %s48, [#allocation8], 128, 128, 8
    $region17: #{tpu_custom_call.1} parent=1 // pred_fallthru
      _
    // Predicated region
    $region18: #{tpu_custom_call.1} parent=1 // pred_check
      _
    $region19: #{tpu_custom_call.1} parent=1 // pred_check_branch
      %55 = sbr.rel (0) target = $region21
    $region20: #{tpu_custom_call.1} parent=1 // pred_region
      _
    $region21: #{tpu_custom_call.1} parent=1 // pred_fallthru
      _
    // Predicated region
    $region22: #{tpu_custom_call.1} parent=1 // pred_check
      _
    $region23: #{tpu_custom_call.1} parent=1 // pred_check_branch
      %57 = sbr.rel (0) target = $region25
    $region24: #{tpu_custom_call.1} parent=1 // pred_region
      %59 = dma.done [#allocation5], 256
    $region25: #{tpu_custom_call.1} parent=1 // pred_fallthru
      _
    // Predicated region
    $region26: #{tpu_custom_call.1} parent=1 // pred_check
      _
    $region27: #{tpu_custom_call.1} parent=1 // pred_check_branch
      %61 = sbr.rel (0) target = $region29
    $region28: #{tpu_custom_call.1} parent=1 // pred_region
      %63 = dma.done [#allocation8], 16384
    $region29: #{tpu_custom_call.1} parent=1 // pred_fallthru
      _
    // Predicated region
    $region30: #{tpu_custom_call.1} parent=1 // pred_check
      _
    $region31: #{tpu_custom_call.1} parent=1 // pred_check_branch
      %65 = sbr.rel (0) target = $region33
    $region32: #{tpu_custom_call.1} parent=1 // pred_region
      %67 = dma.done [#allocation8], 2048
    $region33: #{tpu_custom_call.1} parent=1 // pred_fallthru
      _
    %v68 = vld [vmem:[#allocation4] sm:$0xff]
    %v69 = vld [vmem:[#allocation4 + $0x8] sm:$0xff]
    %v70 = vld [vmem:[#allocation7] sm:$0xff]
    %v71 = vld [vmem:[#allocation7 + $0x8] sm:$0xff]
    %v72 = vld [vmem:[#allocation7 + $0x10] sm:$0xff]
    %v73 = vld [vmem:[#allocation7 + $0x18] sm:$0xff]
    %v74 = vld [vmem:[#allocation7 + $0x20] sm:$0xff]
    %v75 = vld [vmem:[#allocation7 + $0x28] sm:$0xff]
    %v76 = vld [vmem:[#allocation7 + $0x30] sm:$0xff]
    %v77 = vld [vmem:[#allocation7 + $0x38] sm:$0xff]
    %v78 = vld [vmem:[#allocation7 + $0x40] sm:$0xff]
    %v79 = vld [vmem:[#allocation7 + $0x48] sm:$0xff]
    %v80 = vld [vmem:[#allocation7 + $0x50] sm:$0xff]
    %v81 = vld [vmem:[#allocation7 + $0x58] sm:$0xff]
    %v82 = vld [vmem:[#allocation7 + $0x60] sm:$0xff]
    %v83 = vld [vmem:[#allocation7 + $0x68] sm:$0xff]
    %v84 = vld [vmem:[#allocation7 + $0x70] sm:$0xff]
    %v85 = vld [vmem:[#allocation7 + $0x78] sm:$0xff]
    %v86 = vld [vmem:[#allocation7 + $0x80] sm:$0xff]
    %v87 = vld [vmem:[#allocation7 + $0x88] sm:$0xff]
    %v88 = vld [vmem:[#allocation7 + $0x90] sm:$0xff]
    %v89 = vld [vmem:[#allocation7 + $0x98] sm:$0xff]
    %v90 = vld [vmem:[#allocation7 + $0xa0] sm:$0xff]
    %v91 = vld [vmem:[#allocation7 + $0xa8] sm:$0xff]
    %v92 = vld [vmem:[#allocation7 + $0xb0] sm:$0xff]
    %v93 = vld [vmem:[#allocation7 + $0xb8] sm:$0xff]
    %v94 = vld [vmem:[#allocation7 + $0xc0] sm:$0xff]
    %v95 = vld [vmem:[#allocation7 + $0xc8] sm:$0xff]
    %v96 = vld [vmem:[#allocation7 + $0xd0] sm:$0xff]
    %v97 = vld [vmem:[#allocation7 + $0xd8] sm:$0xff]
    %v98 = vld [vmem:[#allocation7 + $0xe0] sm:$0xff]
    %v99 = vld [vmem:[#allocation7 + $0xe8] sm:$0xff]
    %v100 = vld [vmem:[#allocation7 + $0xf0] sm:$0xff]
    %v101 = vld [vmem:[#allocation7 + $0xf8] sm:$0xff]
    %v102 = vld [vmem:[#allocation7 + $0x100] sm:$0xff]
    %v103 = vld [vmem:[#allocation7 + $0x108] sm:$0xff]
    %v104 = vld [vmem:[#allocation7 + $0x110] sm:$0xff]
    %v105 = vld [vmem:[#allocation7 + $0x118] sm:$0xff]
    %v106 = vld [vmem:[#allocation7 + $0x120] sm:$0xff]
    %v107 = vld [vmem:[#allocation7 + $0x128] sm:$0xff]
    %v108 = vld [vmem:[#allocation7 + $0x130] sm:$0xff]
    %v109 = vld [vmem:[#allocation7 + $0x138] sm:$0xff]
    %v110 = vld [vmem:[#allocation7 + $0x140] sm:$0xff]
    %v111 = vld [vmem:[#allocation7 + $0x148] sm:$0xff]
    %v112 = vld [vmem:[#allocation7 + $0x150] sm:$0xff]
    %v113 = vld [vmem:[#allocation7 + $0x158] sm:$0xff]
    %v114 = vld [vmem:[#allocation7 + $0x160] sm:$0xff]
    %v115 = vld [vmem:[#allocation7 + $0x168] sm:$0xff]
    %v116 = vld [vmem:[#allocation7 + $0x170] sm:$0xff]
    %v117 = vld [vmem:[#allocation7 + $0x178] sm:$0xff]
    %v118 = vld [vmem:[#allocation7 + $0x180] sm:$0xff]
    %v119 = vld [vmem:[#allocation7 + $0x188] sm:$0xff]
    %v120 = vld [vmem:[#allocation7 + $0x190] sm:$0xff]
    %v121 = vld [vmem:[#allocation7 + $0x198] sm:$0xff]
    %v122 = vld [vmem:[#allocation7 + $0x1a0] sm:$0xff]
    %v123 = vld [vmem:[#allocation7 + $0x1a8] sm:$0xff]
    %v124 = vld [vmem:[#allocation7 + $0x1b0] sm:$0xff]
    %v125 = vld [vmem:[#allocation7 + $0x1b8] sm:$0xff]
    %v126 = vld [vmem:[#allocation7 + $0x1c0] sm:$0xff]
    %v127 = vld [vmem:[#allocation7 + $0x1c8] sm:$0xff]
    %v128 = vld [vmem:[#allocation7 + $0x1d0] sm:$0xff]
    %v129 = vld [vmem:[#allocation7 + $0x1d8] sm:$0xff]
    %v130 = vld [vmem:[#allocation7 + $0x1e0] sm:$0xff]
    %v131 = vld [vmem:[#allocation7 + $0x1e8] sm:$0xff]
    %v132 = vld [vmem:[#allocation7 + $0x1f0] sm:$0xff]
    %v133 = vld [vmem:[#allocation7 + $0x1f8] sm:$0xff]
    %v134 = vld [vmem:[#allocation7 + $0x200] sm:$0xff]
    %v135 = vld [vmem:[#allocation7 + $0x208] sm:$0xff]
    %v136 = vld [vmem:[#allocation7 + $0x210] sm:$0xff]
    %v137 = vld [vmem:[#allocation7 + $0x218] sm:$0xff]
    %v138 = vld [vmem:[#allocation7 + $0x220] sm:$0xff]
    %v139 = vld [vmem:[#allocation7 + $0x228] sm:$0xff]
    %v140 = vld [vmem:[#allocation7 + $0x230] sm:$0xff]
    %v141 = vld [vmem:[#allocation7 + $0x238] sm:$0xff]
    %v142 = vld [vmem:[#allocation7 + $0x240] sm:$0xff]
    %v143 = vld [vmem:[#allocation7 + $0x248] sm:$0xff]
    %v144 = vld [vmem:[#allocation7 + $0x250] sm:$0xff]
    %v145 = vld [vmem:[#allocation7 + $0x258] sm:$0xff]
    %v146 = vld [vmem:[#allocation7 + $0x260] sm:$0xff]
    %v147 = vld [vmem:[#allocation7 + $0x268] sm:$0xff]
    %v148 = vld [vmem:[#allocation7 + $0x270] sm:$0xff]
    %v149 = vld [vmem:[#allocation7 + $0x278] sm:$0xff]
    %v150 = vld [vmem:[#allocation7 + $0x280] sm:$0xff]
    %v151 = vld [vmem:[#allocation7 + $0x288] sm:$0xff]
    %v152 = vld [vmem:[#allocation7 + $0x290] sm:$0xff]
    %v153 = vld [vmem:[#allocation7 + $0x298] sm:$0xff]
    %v154 = vld [vmem:[#allocation7 + $0x2a0] sm:$0xff]
    %v155 = vld [vmem:[#allocation7 + $0x2a8] sm:$0xff]
    %v156 = vld [vmem:[#allocation7 + $0x2b0] sm:$0xff]
    %v157 = vld [vmem:[#allocation7 + $0x2b8] sm:$0xff]
    %v158 = vld [vmem:[#allocation7 + $0x2c0] sm:$0xff]
    %v159 = vld [vmem:[#allocation7 + $0x2c8] sm:$0xff]
    %v160 = vld [vmem:[#allocation7 + $0x2d0] sm:$0xff]
    %v161 = vld [vmem:[#allocation7 + $0x2d8] sm:$0xff]
    %v162 = vld [vmem:[#allocation7 + $0x2e0] sm:$0xff]
    %v163 = vld [vmem:[#allocation7 + $0x2e8] sm:$0xff]
    %v164 = vld [vmem:[#allocation7 + $0x2f0] sm:$0xff]
    %v165 = vld [vmem:[#allocation7 + $0x2f8] sm:$0xff]
    %v166 = vld [vmem:[#allocation7 + $0x300] sm:$0xff]
    %v167 = vld [vmem:[#allocation7 + $0x308] sm:$0xff]
    %v168 = vld [vmem:[#allocation7 + $0x310] sm:$0xff]
    %v169 = vld [vmem:[#allocation7 + $0x318] sm:$0xff]
    %v170 = vld [vmem:[#allocation7 + $0x320] sm:$0xff]
    %v171 = vld [vmem:[#allocation7 + $0x328] sm:$0xff]
    %v172 = vld [vmem:[#allocation7 + $0x330] sm:$0xff]
    %v173 = vld [vmem:[#allocation7 + $0x338] sm:$0xff]
    %v174 = vld [vmem:[#allocation7 + $0x340] sm:$0xff]
    %v175 = vld [vmem:[#allocation7 + $0x348] sm:$0xff]
    %v176 = vld [vmem:[#allocation7 + $0x350] sm:$0xff]
    %v177 = vld [vmem:[#allocation7 + $0x358] sm:$0xff]
    %v178 = vld [vmem:[#allocation7 + $0x360] sm:$0xff]
    %v179 = vld [vmem:[#allocation7 + $0x368] sm:$0xff]
    %v180 = vld [vmem:[#allocation7 + $0x370] sm:$0xff]
    %v181 = vld [vmem:[#allocation7 + $0x378] sm:$0xff]
    %v182 = vld [vmem:[#allocation7 + $0x380] sm:$0xff]
    %v183 = vld [vmem:[#allocation7 + $0x388] sm:$0xff]
    %v184 = vld [vmem:[#allocation7 + $0x390] sm:$0xff]
    %v185 = vld [vmem:[#allocation7 + $0x398] sm:$0xff]
    %v186 = vld [vmem:[#allocation7 + $0x3a0] sm:$0xff]
    %v187 = vld [vmem:[#allocation7 + $0x3a8] sm:$0xff]
    %v188 = vld [vmem:[#allocation7 + $0x3b0] sm:$0xff]
    %v189 = vld [vmem:[#allocation7 + $0x3b8] sm:$0xff]
    %v190 = vld [vmem:[#allocation7 + $0x3c0] sm:$0xff]
    %v191 = vld [vmem:[#allocation7 + $0x3c8] sm:$0xff]
    %v192 = vld [vmem:[#allocation7 + $0x3d0] sm:$0xff]
    %v193 = vld [vmem:[#allocation7 + $0x3d8] sm:$0xff]
    %v194 = vld [vmem:[#allocation7 + $0x3e0] sm:$0xff]
    %v195 = vld [vmem:[#allocation7 + $0x3e8] sm:$0xff]
    %v196 = vld [vmem:[#allocation7 + $0x3f0] sm:$0xff]
    %v197 = vld [vmem:[#allocation7 + $0x3f8] sm:$0xff]
    %v198 = vld [vmem:[%s3] sm:$0x1]
    %v200 = vperm.slane %v198, 0
    %204 = vst [vmem:[#allocation1] ss:$4 sm:$0xff] %v68
    %s205 = scalar_lea.vmem [#allocation1], 32
    %206 = vst [vmem:[%s205] ss:$4 sm:$0xff] %v69
    %v207 = vld.sshfl [vmem:[#allocation1] sm:$0xff pattern:$0x73625140]
    %v208 = vld.sshfl [vmem:[#allocation1 + $0x8] sm:$0xff pattern:$0x73625140]
    %v209 = vld.sshfl [vmem:[#allocation1 + $0x10] sm:$0xff pattern:$0x73625140]
    %v210 = vld.sshfl [vmem:[#allocation1 + $0x18] sm:$0xff pattern:$0x73625140]
    %v211 = vld.sshfl [vmem:[#allocation1 + $0x20] sm:$0xff pattern:$0x73625140]
    %v212 = vld.sshfl [vmem:[#allocation1 + $0x28] sm:$0xff pattern:$0x73625140]
    %v213 = vld.sshfl [vmem:[#allocation1 + $0x30] sm:$0xff pattern:$0x73625140]
    %v214 = vld.sshfl [vmem:[#allocation1 + $0x38] sm:$0xff pattern:$0x73625140]
    %223 = vmatpush.msra.mxu0 %v85
    %224 = vmatpush.msra.mxu0 %v84
    %225 = vmatpush.msra.mxu0 %v83
    %226 = vmatpush.msra.mxu0 %v82
    %227 = vmatpush.msra.mxu0 %v81
    %228 = vmatpush.msra.mxu0 %v80
    %229 = vmatpush.msra.mxu0 %v79
    %230 = vmatpush.msra.mxu0 %v78
    %231 = vmatpush.msra.mxu0 %v77
    %232 = vmatpush.msra.mxu0 %v76
    %233 = vmatpush.msra.mxu0 %v75
    %234 = vmatpush.msra.mxu0 %v74
    %235 = vmatpush.msra.mxu0 %v73
    %236 = vmatpush.msra.mxu0 %v72
    %237 = vmatpush.msra.mxu0 %v71
    %238 = vmatpush.msra.mxu0 %v70
    %239 = vmatmul.f32.gmra.mxu0 %v207
    %v240 = vpop.f32.mrf.mxu0
    %v241 = vadd.f32 %v200, %v240
    %242 = vdwg.mxu0
    %243 = vmatpush.msra.mxu0 %v101
    %244 = vmatpush.msra.mxu0 %v100
    %245 = vmatpush.msra.mxu0 %v99
    %246 = vmatpush.msra.mxu0 %v98
    %247 = vmatpush.msra.mxu0 %v97
    %248 = vmatpush.msra.mxu0 %v96
    %249 = vmatpush.msra.mxu0 %v95
    %250 = vmatpush.msra.mxu0 %v94
    %251 = vmatpush.msra.mxu0 %v93
    %252 = vmatpush.msra.mxu0 %v92
    %253 = vmatpush.msra.mxu0 %v91
    %254 = vmatpush.msra.mxu0 %v90
    %255 = vmatpush.msra.mxu0 %v89
    %256 = vmatpush.msra.mxu0 %v88
    %257 = vmatpush.msra.mxu0 %v87
    %258 = vmatpush.msra.mxu0 %v86
    %259 = vmatmul.f32.gmra.mxu0 %v208
    %v260 = vpop.f32.mrf.mxu0
    %v261 = vadd.f32 %v241, %v260
    %262 = vdwg.mxu0
    %263 = vmatpush.msra.mxu0 %v117
    %264 = vmatpush.msra.mxu0 %v116
    %265 = vmatpush.msra.mxu0 %v115
    %266 = vmatpush.msra.mxu0 %v114
    %267 = vmatpush.msra.mxu0 %v113
    %268 = vmatpush.msra.mxu0 %v112
    %269 = vmatpush.msra.mxu0 %v111
    %270 = vmatpush.msra.mxu0 %v110
    %271 = vmatpush.msra.mxu0 %v109
    %272 = vmatpush.msra.mxu0 %v108
    %273 = vmatpush.msra.mxu0 %v107
    %274 = vmatpush.msra.mxu0 %v106
    %275 = vmatpush.msra.mxu0 %v105
    %276 = vmatpush.msra.mxu0 %v104
    %277 = vmatpush.msra.mxu0 %v103
    %278 = vmatpush.msra.mxu0 %v102
    %279 = vmatmul.f32.gmra.mxu0 %v209
    %v280 = vpop.f32.mrf.mxu0
    %v281 = vadd.f32 %v261, %v280
    %282 = vdwg.mxu0
    %283 = vmatpush.msra.mxu0 %v133
    %284 = vmatpush.msra.mxu0 %v132
    %285 = vmatpush.msra.mxu0 %v131
    %286 = vmatpush.msra.mxu0 %v130
    %287 = vmatpush.msra.mxu0 %v129
    %288 = vmatpush.msra.mxu0 %v128
    %289 = vmatpush.msra.mxu0 %v127
    %290 = vmatpush.msra.mxu0 %v126
    %291 = vmatpush.msra.mxu0 %v125
    %292 = vmatpush.msra.mxu0 %v124
    %293 = vmatpush.msra.mxu0 %v123
    %294 = vmatpush.msra.mxu0 %v122
    %295 = vmatpush.msra.mxu0 %v121
    %296 = vmatpush.msra.mxu0 %v120
    %297 = vmatpush.msra.mxu0 %v119
    %298 = vmatpush.msra.mxu0 %v118
    %299 = vmatmul.f32.gmra.mxu0 %v210
    %v300 = vpop.f32.mrf.mxu0
    %v301 = vadd.f32 %v281, %v300
    %302 = vdwg.mxu0
    %303 = vmatpush.msra.mxu0 %v149
    %304 = vmatpush.msra.mxu0 %v148
    %305 = vmatpush.msra.mxu0 %v147
    %306 = vmatpush.msra.mxu0 %v146
    %307 = vmatpush.msra.mxu0 %v145
    %308 = vmatpush.msra.mxu0 %v144
    %309 = vmatpush.msra.mxu0 %v143
    %310 = vmatpush.msra.mxu0 %v142
    %311 = vmatpush.msra.mxu0 %v141
    %312 = vmatpush.msra.mxu0 %v140
    %313 = vmatpush.msra.mxu0 %v139
    %314 = vmatpush.msra.mxu0 %v138
    %315 = vmatpush.msra.mxu0 %v137
    %316 = vmatpush.msra.mxu0 %v136
    %317 = vmatpush.msra.mxu0 %v135
    %318 = vmatpush.msra.mxu0 %v134
    %319 = vmatmul.f32.gmra.mxu0 %v211
    %v320 = vpop.f32.mrf.mxu0
    %v321 = vadd.f32 %v301, %v320
    %322 = vdwg.mxu0
    %323 = vmatpush.msra.mxu0 %v165
    %324 = vmatpush.msra.mxu0 %v164
    %325 = vmatpush.msra.mxu0 %v163
    %326 = vmatpush.msra.mxu0 %v162
    %327 = vmatpush.msra.mxu0 %v161
    %328 = vmatpush.msra.mxu0 %v160
    %329 = vmatpush.msra.mxu0 %v159
    %330 = vmatpush.msra.mxu0 %v158
    %331 = vmatpush.msra.mxu0 %v157
    %332 = vmatpush.msra.mxu0 %v156
    %333 = vmatpush.msra.mxu0 %v155
    %334 = vmatpush.msra.mxu0 %v154
    %335 = vmatpush.msra.mxu0 %v153
    %336 = vmatpush.msra.mxu0 %v152
    %337 = vmatpush.msra.mxu0 %v151
    %338 = vmatpush.msra.mxu0 %v150
    %339 = vmatmul.f32.gmra.mxu0 %v212
    %v340 = vpop.f32.mrf.mxu0
    %v341 = vadd.f32 %v321, %v340
    %342 = vdwg.mxu0
    %343 = vmatpush.msra.mxu0 %v181
    %344 = vmatpush.msra.mxu0 %v180
    %345 = vmatpush.msra.mxu0 %v179
    %346 = vmatpush.msra.mxu0 %v178
    %347 = vmatpush.msra.mxu0 %v177
    %348 = vmatpush.msra.mxu0 %v176
    %349 = vmatpush.msra.mxu0 %v175
    %350 = vmatpush.msra.mxu0 %v174
    %351 = vmatpush.msra.mxu0 %v173
    %352 = vmatpush.msra.mxu0 %v172
    %353 = vmatpush.msra.mxu0 %v171
    %354 = vmatpush.msra.mxu0 %v170
    %355 = vmatpush.msra.mxu0 %v169
    %356 = vmatpush.msra.mxu0 %v168
    %357 = vmatpush.msra.mxu0 %v167
    %358 = vmatpush.msra.mxu0 %v166
    %359 = vmatmul.f32.gmra.mxu0 %v213
    %v360 = vpop.f32.mrf.mxu0
    %v361 = vadd.f32 %v341, %v360
    %362 = vdwg.mxu0
    %363 = vmatpush.msra.mxu0 %v197
    %364 = vmatpush.msra.mxu0 %v196
    %365 = vmatpush.msra.mxu0 %v195
    %366 = vmatpush.msra.mxu0 %v194
    %367 = vmatpush.msra.mxu0 %v193
    %368 = vmatpush.msra.mxu0 %v192
    %369 = vmatpush.msra.mxu0 %v191
    %370 = vmatpush.msra.mxu0 %v190
    %371 = vmatpush.msra.mxu0 %v189
    %372 = vmatpush.msra.mxu0 %v188
    %373 = vmatpush.msra.mxu0 %v187
    %374 = vmatpush.msra.mxu0 %v186
    %375 = vmatpush.msra.mxu0 %v185
    %376 = vmatpush.msra.mxu0 %v184
    %377 = vmatpush.msra.mxu0 %v183
    %378 = vmatpush.msra.mxu0 %v182
    %379 = vmatmul.f32.gmra.mxu0 %v214
    %v380 = vpop.f32.mrf.mxu0
    %v381 = vadd.f32 %v361, %v380
    %382 = vdwg.mxu0
    %v383 = vmax.f32 %v381, 0.0
    %v384 = vld [vmem:[#allocation9] sm:$0xff]
    %v385 = vld [vmem:[#allocation9 + $0x8] sm:$0xff]
    %v386 = vld [vmem:[#allocation9 + $0x10] sm:$0xff]
    %v387 = vld [vmem:[#allocation9 + $0x18] sm:$0xff]
    %v388 = vld [vmem:[#allocation9 + $0x20] sm:$0xff]
    %v389 = vld [vmem:[#allocation9 + $0x28] sm:$0xff]
    %v390 = vld [vmem:[#allocation9 + $0x30] sm:$0xff]
    %v391 = vld [vmem:[#allocation9 + $0x38] sm:$0xff]
    %v392 = vld [vmem:[#allocation9 + $0x40] sm:$0xff]
    %v393 = vld [vmem:[#allocation9 + $0x48] sm:$0xff]
    %v394 = vld [vmem:[#allocation9 + $0x50] sm:$0xff]
    %v395 = vld [vmem:[#allocation9 + $0x58] sm:$0xff]
    %v396 = vld [vmem:[#allocation9 + $0x60] sm:$0xff]
    %v397 = vld [vmem:[#allocation9 + $0x68] sm:$0xff]
    %v398 = vld [vmem:[#allocation9 + $0x70] sm:$0xff]
    %v399 = vld [vmem:[#allocation9 + $0x78] sm:$0xff]
    %v400 = vld [vmem:[%s5] sm:$0x1]
    %v402 = vperm.slane %v400, 0
    %404 = vmatpush.msra.mxu0 %v399
    %405 = vmatpush.msra.mxu0 %v398
    %406 = vmatpush.msra.mxu0 %v397
    %407 = vmatpush.msra.mxu0 %v396
    %408 = vmatpush.msra.mxu0 %v395
    %409 = vmatpush.msra.mxu0 %v394
    %410 = vmatpush.msra.mxu0 %v393
    %411 = vmatpush.msra.mxu0 %v392
    %412 = vmatpush.msra.mxu0 %v391
    %413 = vmatpush.msra.mxu0 %v390
    %414 = vmatpush.msra.mxu0 %v389
    %415 = vmatpush.msra.mxu0 %v388
    %416 = vmatpush.msra.mxu0 %v387
    %417 = vmatpush.msra.mxu0 %v386
    %418 = vmatpush.msra.mxu0 %v385
    %419 = vmatpush.msra.mxu0 %v384
    %420 = vmatmul.f32.gmra.mxu0 %v383
    %v421 = vpop.f32.mrf.mxu0
    %v422 = vadd.f32 %v402, %v421
    %423 = vdwg.mxu0
    %v424 = vpack.c.bf16 %v422, %v422
    %425 = vst [vmem:[#allocation10] sm:$0x1] %v424
    // Predicated region
    $region34: #{tpu_custom_call.1} parent=1 // pred_check
      _
    $region35: #{tpu_custom_call.1} parent=1 // pred_check_branch
      %427 = sbr.rel (0) target = $region37
    $region36: #{tpu_custom_call.1} parent=1 // pred_region
      %429 = vsyncadd [#allocation6], 0
      %s431 = sshll.u32 [#allocation10], 4
      %s432 = int_to_ptr.vmem [resolvable:$true] %s431
      %s433 = sshll.u32 %s6, 4
      %s434 = int_to_ptr.hbm [resolvable:$true] %s433
      %436 = dma.vmem_to_hbm [thread:$0]  %s432, 16, %s434, [#allocation6]
    $region37: #{tpu_custom_call.1} parent=1 // pred_fallthru
      _
    // Predicated region
    $region38: #{tpu_custom_call.1} parent=1 // pred_check
      _
    $region39: #{tpu_custom_call.1} parent=1 // pred_check_branch
      %438 = sbr.rel (0) target = $region41
    $region40: #{tpu_custom_call.1} parent=1 // pred_region
      %440 = dma.done [#allocation6], 16
    $region41: #{tpu_custom_call.1} parent=1 // pred_fallthru
      _
    %441 = vsyncpa [#allocation5], 1
    %442 = vsyncpa [#allocation8], 1
    %443 = vsyncpa [#allocation6], 1

</llo_original>
